<compile_context>
chip_gen: v7x
topology: tpu7x:2x2x1
jax: 0.10.0
libtpu: 0.0.40
codegen_flags: <defaults>
</compile_context>

<pallas_src>
import functools
import jax
import jax.numpy as jnp
from jax import lax
from jax.experimental import pallas as pl
from jax.experimental.pallas import tpu as pltpu

COMPUTE_DTYPE = jnp.bfloat16   # MXU operand / inter-kernel activation dtype
LN_EPS = 1e-5                  # PyTorch nn.LayerNorm default


# ----------------------------------------------------------------------------
# Tiling helper
# ----------------------------------------------------------------------------

def _tile(dim, target, base):
    """Largest multiple of `base` that divides `dim` and is <= target, else dim."""
    if dim <= target:
        return dim
    t = (target // base) * base
    while t >= base:
        if dim % t == 0:
            return t
        t -= base
    return dim


# ----------------------------------------------------------------------------
# Kernels
# ----------------------------------------------------------------------------

def matmul_bias_kernel(x_ref, w_ref, b_ref, o_ref, acc_ref, *, activation):
    # o = act(x @ w + b), tiled over (m, n, k); acc_ref is the f32 accumulator.
    @pl.when(pl.program_id(2) == 0)
    def _():
        acc_ref[...] = jnp.zeros_like(acc_ref)

    acc_ref[...] += jnp.dot(
        x_ref[...].astype(COMPUTE_DTYPE),
        w_ref[...].astype(COMPUTE_DTYPE),
        preferred_element_type=jnp.float32,
    )

    @pl.when(pl.program_id(2) == pl.num_programs(2) - 1)
    def _():
        r = acc_ref[...] + b_ref[...].astype(jnp.float32)
        if activation == "relu":
            r = jnp.maximum(r, 0.0)
        o_ref[...] = r.astype(o_ref.dtype)


def matmul_bias_add_ln_kernel(x_ref, w_ref, b_ref, res_ref, g_ref, bt_ref,
                              o_ref, acc_ref, *, eps):
    # o = LayerNorm(res + x @ w + b)  — residual add + LN fused into the
    # epilogue of the final k-step (row dim N kept whole for the LN).
    @pl.when(pl.program_id(1) == 0)
    def _():
        acc_ref[...] = jnp.zeros_like(acc_ref)

    acc_ref[...] += jnp.dot(
        x_ref[...].astype(COMPUTE_DTYPE),
        w_ref[...].astype(COMPUTE_DTYPE),
        preferred_element_type=jnp.float32,
    )

    @pl.when(pl.program_id(1) == pl.num_programs(1) - 1)
    def _():
        h = (acc_ref[...] + b_ref[...].astype(jnp.float32)
             + res_ref[...].astype(jnp.float32))
        mean = jnp.mean(h, axis=-1, keepdims=True)
        var = jnp.mean(jnp.square(h - mean), axis=-1, keepdims=True)
        hn = (h - mean) * lax.rsqrt(var + eps)
        o_ref[...] = (hn * g_ref[...].astype(jnp.float32)
                      + bt_ref[...].astype(jnp.float32)).astype(o_ref.dtype)


def attention_kernel(q_ref, k_ref, v_ref, m_ref, o_ref, *, heads):
    # One batch element per grid step; softmax scale is pre-folded into Wq.
    # TODO(synk): at production S/E, tile Sq (parallel grid axis), add a
    # kv-tile online-softmax loop, move heads into the grid (so D >= 128 MXU
    # contractions) and switch the Python head loop to lax.fori_loop to bound
    # vreg live ranges with many heads.
    E = q_ref.shape[2]
    D = E // heads

    q = q_ref[0]                       # (Sq, E) bf16
    k = k_ref[0]                       # (Sk, E) bf16
    v = v_ref[0]                       # (Sk, E) bf16

    # Additive mask bias, computed once per batch (not per head). int8 mask:
    # 0 == masked out. -1e30 instead of -inf avoids NaN on fully-masked rows
    # (minor divergence vs PyTorch).
    bias = jnp.where(m_ref[0] == 0, -1e30, 0.0).astype(jnp.float32)  # (Sq, Sk)

    outs = []
    for h in range(heads):
        lo = h * D
        qh = q[:, lo:lo + D]
        kh = k[:, lo:lo + D]
        vh = v[:, lo:lo + D]
        # Contract the last axes of both operands directly — no materialized
        # K transpose.
        s = lax.dot_general(qh, kh, (((1,), (1,)), ((), ())),
                            preferred_element_type=jnp.float32) + bias
        s = s - jnp.max(s, axis=-1, keepdims=True)
        p = jnp.exp(s)
        p = p * pl.reciprocal(jnp.sum(p, axis=-1, keepdims=True), approx=True)
        outs.append(jnp.dot(p.astype(vh.dtype), vh,
                            preferred_element_type=jnp.float32))

    # Single lane-dense store of all heads (no per-head narrow stores).
    o_ref[0] = jnp.concatenate(outs, axis=-1).astype(o_ref.dtype)


# ----------------------------------------------------------------------------
# Pallas-call wrappers
# ----------------------------------------------------------------------------

def matmul_bias(x, w, b, activation="none", out_dtype=COMPUTE_DTYPE,
                tm=256, tn=256, tk=512):
    M, K = x.shape
    N = w.shape[1]
    tm = _tile(M, tm, 16)    # bf16 sublane base
    tn = _tile(N, tn, 128)
    tk = _tile(K, tk, 128)
    kern = functools.partial(matmul_bias_kernel, activation=activation)
    return pl.pallas_call(
        kern,
        out_shape=jax.ShapeDtypeStruct((M, N), out_dtype),
        grid=(M // tm, N // tn, K // tk),
        in_specs=[pl.BlockSpec((tm, tk), lambda i, j, k: (i, k)),
                  pl.BlockSpec((tk, tn), lambda i, j, k: (k, j)),
                  pl.BlockSpec((1, tn), lambda i, j, k: (0, j))],
        out_specs=pl.BlockSpec((tm, tn), lambda i, j, k: (i, j)),
        scratch_shapes=[pltpu.VMEM((tm, tn), jnp.float32)],
        compiler_params=pltpu.CompilerParams(
            dimension_semantics=("parallel", "parallel", "arbitrary")),
    )(x, w, b.reshape(1, N))


def matmul_bias_add_ln(x, w, b, res, gamma, beta, eps=LN_EPS, tm=256, tk=256):
    # tk=256 (vs 512) keeps the full-N-resident bf16 weight tiles + f32
    # acc/res/out double-buffered inside v7x's 64 MiB VMEM at production E/H;
    # raise tk (and vmem_limit_bytes) on v5e/v6e if the k-loop gets short.
    M, K = x.shape
    N = w.shape[1]
    tm = _tile(M, tm, 16)
    tk = _tile(K, tk, 128)
    kern = functools.partial(matmul_bias_add_ln_kernel, eps=eps)
    return pl.pallas_call(
        kern,
        out_shape=jax.ShapeDtypeStruct((M, N), jnp.float32),
        grid=(M // tm, K // tk),
        in_specs=[pl.BlockSpec((tm, tk), lambda i, k: (i, k)),
                  pl.BlockSpec((tk, N), lambda i, k: (k, 0)),
                  pl.BlockSpec((1, N), lambda i, k: (0, 0)),
                  pl.BlockSpec((tm, N), lambda i, k: (i, 0)),
                  pl.BlockSpec((1, N), lambda i, k: (0, 0)),
                  pl.BlockSpec((1, N), lambda i, k: (0, 0))],
        out_specs=pl.BlockSpec((tm, N), lambda i, k: (i, 0)),
        scratch_shapes=[pltpu.VMEM((tm, N), jnp.float32)],
        compiler_params=pltpu.CompilerParams(
            dimension_semantics=("parallel", "arbitrary")),
    )(x, w, b.reshape(1, N), res, gamma.reshape(1, N), beta.reshape(1, N))


def _col_spec(S, E, col):
    # Column-block spec into a (B, S, n*E) fused projection output: selects
    # columns [col*E : (col+1)*E] — no XLA-side slice copies.
    return pl.BlockSpec((1, S, E), lambda b: (b, 0, col))


def attention_core(q_arr, kv_arr, q_col, k_col, v_col, mask_i8, heads, E):
    B, Sq = q_arr.shape[0], q_arr.shape[1]
    Sk = kv_arr.shape[1]
    kern = functools.partial(attention_kernel, heads=heads)
    return pl.pallas_call(
        kern,
        out_shape=jax.ShapeDtypeStruct((B, Sq, E), COMPUTE_DTYPE),
        grid=(B,),
        in_specs=[_col_spec(Sq, E, q_col),
                  _col_spec(Sk, E, k_col),
                  _col_spec(Sk, E, v_col),
                  pl.BlockSpec((1, Sq, Sk), lambda b: (b, 0, 0))],
        out_specs=pl.BlockSpec((1, Sq, E), lambda b: (b, 0, 0)),
        compiler_params=pltpu.CompilerParams(
            dimension_semantics=("parallel",)),
    )(q_arr, kv_arr, kv_arr, mask_i8)


# ----------------------------------------------------------------------------
# Module-level composition (thin JAX glue)
# ----------------------------------------------------------------------------

def prep_mask(mask, B, Sq, Sk):
    # PyTorch-style broadcastable mask (1 = attend, 0 = masked) -> int8 (B,Sq,Sk)
    m = (mask != 0).astype(jnp.int8)
    return jnp.broadcast_to(m, (B, 1, Sq, Sk)).reshape(B, Sq, Sk)


def self_attention_block(x, mask, p, heads, gamma, beta):
    B, S, E = x.shape
    M = B * S
    x2 = x.reshape(M, E)

    # fused QKV projection (pre-fused weight, softmax scale folded into Wq)
    qkv = matmul_bias(x2, p["wqkv"], p["bqkv"])              # (M, 3E) bf16
    qkv3 = qkv.reshape(B, S, 3 * E)

    mask_i8 = prep_mask(mask, B, S, S)
    attn = attention_core(qkv3, qkv3, 0, 1, 2, mask_i8, heads, E)

    out = matmul_bias_add_ln(attn.reshape(M, E), p["wo"], p["bo"],
                             x2, gamma, beta)
    return out.reshape(B, S, E)


def cross_attention_block(x, enc, mask, p, heads, gamma, beta):
    B, Sq, E = x.shape
    Sk = enc.shape[1]
    x2 = x.reshape(B * Sq, E)

    q3 = matmul_bias(x2, p["wq"], p["bq"]).reshape(B, Sq, E)            # bf16
    kv3 = matmul_bias(enc.reshape(B * Sk, E), p["wkv"], p["bkv"]
                      ).reshape(B, Sk, 2 * E)                           # bf16

    mask_i8 = prep_mask(mask, B, Sq, Sk)
    attn = attention_core(q3, kv3, 0, 0, 1, mask_i8, heads, E)

    out = matmul_bias_add_ln(attn.reshape(B * Sq, E), p["wo"], p["bo"],
                             x2, gamma, beta)
    return out.reshape(B, Sq, E)


def ffn_block(x, params, gamma, beta):
    B, S, E = x.shape
    x2 = x.reshape(B * S, E)
    h = matmul_bias(x2, params["ff_w1"], params["ff_b1"], activation="relu")
    out = matmul_bias_add_ln(h, params["ff_w2"], params["ff_b2"],
                             x2, gamma, beta)
    return out.reshape(B, S, E)


def decoder_layer(x, enc_out, src_mask, tgt_mask, params, heads):
    # dropout == identity (inference); stochastic dropout would use
    # pltpu.prng_seed / pltpu.prng_random_bits inside the epilogue kernels.
    x1 = self_attention_block(x, tgt_mask, params["self_attn"], heads,
                              params["norm1_g"], params["norm1_b"])
    x2 = cross_attention_block(x1, enc_out, src_mask, params["cross_attn"],
                               heads, params["norm2_g"], params["norm2_b"])
    return ffn_block(x2, params, params["norm3_g"], params["norm3_b"])


# ----------------------------------------------------------------------------
# Deterministic parameter construction (pre-fused, pre-scaled, bf16 weights)
# ----------------------------------------------------------------------------

def make_attn_params(key, E, heads, cross):
    D = E // heads
    scale = 1.0 / float(D) ** 0.5
    ks = jax.random.split(key, 3)

    def lin(k, n_out):
        return 0.02 * jax.random.normal(k, (E, n_out), jnp.float32)

    wo = lin(ks[2], E).astype(COMPUTE_DTYPE)
    bo = jnp.zeros((E,), jnp.float32)
    if cross:
        return {
            "wq": (lin(ks[0], E) * scale).astype(COMPUTE_DTYPE),
            "bq": jnp.zeros((E,), jnp.float32) * scale,
            "wkv": lin(ks[1], 2 * E).astype(COMPUTE_DTYPE),
            "bkv": jnp.zeros((2 * E,), jnp.float32),
            "wo": wo, "bo": bo,
        }
    wqkv = lin(ks[0], 3 * E)
    wqkv = wqkv.at[:, :E].multiply(scale)          # fold 1/sqrt(D) into Wq
    bqkv = jnp.zeros((3 * E,), jnp.float32).at[:E].multiply(scale)
    return {"wqkv": wqkv.astype(COMPUTE_DTYPE), "bqkv": bqkv,
            "wo": wo, "bo": bo}


def make_params(key, E, H, heads):
    k1, k2, k3, k4 = jax.random.split(key, 4)
    return {
        "self_attn": make_attn_params(k1, E, heads, cross=False),
        "cross_attn": make_attn_params(k2, E, heads, cross=True),
        "ff_w1": (0.02 * jax.random.normal(k3, (E, H), jnp.float32)
                  ).astype(COMPUTE_DTYPE),
        "ff_b1": jnp.zeros((H,), jnp.float32),
        "ff_w2": (0.02 * jax.random.normal(k4, (H, E), jnp.float32)
                  ).astype(COMPUTE_DTYPE),
        "ff_b2": jnp.zeros((E,), jnp.float32),
        "norm1_g": jnp.ones((E,), jnp.float32), "norm1_b": jnp.zeros((E,), jnp.float32),
        "norm2_g": jnp.ones((E,), jnp.float32), "norm2_b": jnp.zeros((E,), jnp.float32),
        "norm3_g": jnp.ones((E,), jnp.float32), "norm3_b": jnp.zeros((E,), jnp.float32),
    }


# ----------------------------------------------------------------------------

if __name__ == "__main__":
    B, S_TGT, S_SRC = 2, 8, 8
    EMBED, HEADS, HIDDEN = 32, 4, 64

    root = jax.random.PRNGKey(0)
    kx, ke, kp = jax.random.split(root, 3)

    x = jax.random.normal(kx, (B, S_TGT, EMBED), jnp.float32)
    enc_out = jax.random.normal(ke, (B, S_SRC, EMBED), jnp.float32)

    # masks: 1 = attend, 0 = masked (PyTorch-style masked_fill(mask == 0, -inf))
    tgt_mask = jnp.tril(jnp.ones((S_TGT, S_TGT), jnp.float32))[None, None]  # (1,1,St,St)
    src_mask = jnp.ones((B, 1, 1, S_SRC), jnp.float32)                      # no padding

    params = make_params(kp, EMBED, HIDDEN, HEADS)

    out = decoder_layer(x, enc_out, src_mask, tgt_mask, params, HEADS)
    out = jax.block_until_ready(out)

    assert out.shape == (B, S_TGT, EMBED)
    assert bool(jnp.all(jnp.isfinite(out)))
    print("KERNEL_OK")
</pallas_src>

<mosaic_0001>
module attributes {stable_mosaic.version = 11 : i64} {
  func.func @matmul_bias_kernel(%arg0: i32, %arg1: i32, %arg2: i32, %arg3: memref<16x32xf32, #tpu.memory_space<vmem>>, %arg4: memref<32x96xbf16, #tpu.memory_space<vmem>>, %arg5: memref<1x96xf32, #tpu.memory_space<vmem>>, %arg6: memref<16x96xbf16, #tpu.memory_space<vmem>>, %arg7: memref<16x96xf32, #tpu.memory_space<vmem>>) attributes {dimension_semantics = [#tpu.dimension_semantics<parallel>, #tpu.dimension_semantics<parallel>, #tpu.dimension_semantics<arbitrary>], iteration_bounds = array<i64: 1, 1, 1>, scalar_prefetch = 0 : i64, scratch_operands = 1 : i64, tpu.core_type = #tpu.core_type<tc>, window_params = [{transform_indices = @transform_0, window_bounds = array<i64: 16, 32>}, {transform_indices = @transform_1, window_bounds = array<i64: 32, 96>}, {transform_indices = @transform_2, window_bounds = array<i64: 1, 96>}, {transform_indices = @transform_3, window_bounds = array<i64: 16, 96>}]} {
    %c0_i32 = arith.constant 0 : i32
    %0 = arith.cmpi eq, %arg2, %c0_i32 : i32
    %1 = arith.extui %0 : i1 to i32
    %c0_i32_0 = arith.constant 0 : i32
    %2 = arith.cmpi ne, %1, %c0_i32_0 : i32
    scf.if %2 {
      %cst_10 = arith.constant 0.000000e+00 : f32
      %13 = vector.broadcast %cst_10 : f32 to vector<16x96xf32>
      %c0_11 = arith.constant 0 : index
      %c0_12 = arith.constant 0 : index
      %14 = vector.load %arg7[%c0_11, %c0_12] : memref<16x96xf32, #tpu.memory_space<vmem>>, vector<16x96xf32>
      tpu.vector_store %arg7[%c0_11, %c0_12], %13 {strides = array<i32>} : memref<16x96xf32, #tpu.memory_space<vmem>>, vector<16x96xf32>,
    } else {
    }
    %c0 = arith.constant 0 : index
    %c0_1 = arith.constant 0 : index
    %3 = vector.load %arg7[%c0, %c0_1] : memref<16x96xf32, #tpu.memory_space<vmem>>, vector<16x96xf32>
    %c0_2 = arith.constant 0 : index
    %c0_3 = arith.constant 0 : index
    %4 = vector.load %arg3[%c0_2, %c0_3] : memref<16x32xf32, #tpu.memory_space<vmem>>, vector<16x32xf32>
    %5 = arith.truncf %4 : vector<16x32xf32> to vector<16x32xbf16>
    %c0_4 = arith.constant 0 : index
    %c0_5 = arith.constant 0 : index
    %6 = vector.load %arg4[%c0_4, %c0_5] : memref<32x96xbf16, #tpu.memory_space<vmem>>, vector<32x96xbf16>
    %cst = arith.constant dense<0.000000e+00> : vector<16x96xf32>
    %7 = tpu.matmul %5, %6, %cst {dimension_numbers = #tpu.dot_dimension_numbers<[1], [0], [0], [1], [0, 0, 1, 1], [], []>} : vector<16x32xbf16>, vector<32x96xbf16>, vector<16x96xf32> -> vector<16x96xf32>
    %8 = arith.addf %3, %7 : vector<16x96xf32>
    %c0_6 = arith.constant 0 : index
    %c0_7 = arith.constant 0 : index
    %9 = vector.load %arg7[%c0_6, %c0_7] : memref<16x96xf32, #tpu.memory_space<vmem>>, vector<16x96xf32>
    tpu.vector_store %arg7[%c0_6, %c0_7], %8 {strides = array<i32>} : memref<16x96xf32, #tpu.memory_space<vmem>>, vector<16x96xf32>,
    %c0_i32_8 = arith.constant 0 : i32
    %10 = arith.cmpi eq, %arg2, %c0_i32_8 : i32
    %11 = arith.extui %10 : i1 to i32
    %c0_i32_9 = arith.constant 0 : i32
    %12 = arith.cmpi ne, %11, %c0_i32_9 : i32
    scf.if %12 {
      %c0_10 = arith.constant 0 : index
      %c0_11 = arith.constant 0 : index
      %13 = vector.load %arg7[%c0_10, %c0_11] : memref<16x96xf32, #tpu.memory_space<vmem>>, vector<16x96xf32>
      %c0_12 = arith.constant 0 : index
      %c0_13 = arith.constant 0 : index
      %14 = vector.load %arg5[%c0_12, %c0_13] : memref<1x96xf32, #tpu.memory_space<vmem>>, vector<1x96xf32>
      %15 = vector.broadcast %14 : vector<1x96xf32> to vector<16x96xf32>
      %16 = arith.addf %13, %15 : vector<16x96xf32>
      %17 = arith.truncf %16 : vector<16x96xf32> to vector<16x96xbf16>
      %c0_14 = arith.constant 0 : index
      %c0_15 = arith.constant 0 : index
      %18 = vector.load %arg6[%c0_14, %c0_15] : memref<16x96xbf16, #tpu.memory_space<vmem>>, vector<16x96xbf16>
      tpu.vector_store %arg6[%c0_14, %c0_15], %17 {strides = array<i32>} : memref<16x96xbf16, #tpu.memory_space<vmem>>, vector<16x96xbf16>,
    } else {
    }
    return
  }
  func.func @transform_0(%arg0: i32, %arg1: i32, %arg2: i32) -> (i32, i32) {
    %c0_i32 = arith.constant 0 : i32
    return %arg0, %arg2 : i32, i32
  }
  func.func @transform_1(%arg0: i32, %arg1: i32, %arg2: i32) -> (i32, i32) {
    %c0_i32 = arith.constant 0 : i32
    return %arg2, %arg1 : i32, i32
  }
  func.func @transform_2(%arg0: i32, %arg1: i32, %arg2: i32) -> (i32, i32) {
    %c0_i32 = arith.constant 0 : i32
    %c0_i32_0 = arith.constant 0 : i32
    return %c0_i32, %arg1 : i32, i32
  }
  func.func @transform_3(%arg0: i32, %arg1: i32, %arg2: i32) -> (i32, i32) {
    %c0_i32 = arith.constant 0 : i32
    return %arg0, %arg1 : i32, i32
  }
}

</mosaic_0001>

<llo_original>
// kernel: tpu_custom_call.1
$region0: #{tpu_custom_call.1}
  #allocation0 [shape = 'u32[]', space=smem, size = 0x4, offset = 0x4, fixed_abs, tag = 'smem constant byte address 0x4 - core index']
  #allocation1 [shape = 'u32[144,128]{1,0:T(1,128)}', space=vmem, size = 0x12000, scoped, tag = 'internal scratch']
  #allocation2 [shape = 'f32[16,96]{1,0:T(8,128)}', space=vmem, size = 0x2000, scoped, tag = 'scratch operand']
  %s0 = inlined_call_operand.hbm [shape: f32[16,32], index: 0, kind: input, shape index: {}]
  %s1 = inlined_call_operand.hbm [shape: bf16[32,96], index: 1, kind: input, shape index: {}]
  %s2 = inlined_call_operand.vmem [shape: f32[1,96], index: 2, kind: input, shape index: {}]
  %s3 = inlined_call_operand.hbm [shape: bf16[16,96], index: 3, kind: output, shape index: {}]
  %s4 = sld [smem:[#allocation0]]
  $region38: #{tpu_custom_call.1} parent=0
    _
  %s6 = ssub.s32 1, %s4
  %s7 = scalar_select 0, %s6, %s4
  $region1: #{tpu_custom_call.1} parent=0
    #allocation3 [shape = 'u8[8192]{0}', space=vmem, size = 0x2000, scoped, tag = 'input window, operand 0, single buffered']
    #allocation4 [shape = 's32[1]{0}', space=sflag, size = 0x4, scoped, tag = 'scoped memory for tpu_custom_call.1']
    #allocation5 [shape = 's32[1]{0}', space=sflag, size = 0x4, scoped, tag = 'scoped memory for tpu_custom_call.1']
    #allocation6 [shape = 'u8[8192]{0}', space=vmem, size = 0x2000, scoped, tag = 'input window, operand 1, single buffered']
    #allocation7 [shape = 's32[1]{0}', space=sflag, size = 0x4, scoped, tag = 'scoped memory for tpu_custom_call.1']
    #allocation8 [shape = 'u8[4096]{0}', space=vmem, size = 0x1000, scoped, tag = 'output window, operand 0, single buffered']
    %8 = vsyncpa [#allocation4], 0
    %9 = vsyncpa [#allocation7], 0
    %10 = vsyncpa [#allocation5], 0
    // Predicated region
    $region2: #{tpu_custom_call.1} parent=1 // pred_check
      _
    $region3: #{tpu_custom_call.1} parent=1 // pred_check_branch
      %12 = sbr.rel (0) target = $region5
    $region4: #{tpu_custom_call.1} parent=1 // pred_region
      %s14 = ssub.s32 256, 256
      %15 = vsyncadd [#allocation4], %s14
      %s16 = sshll.u32 [#allocation3], 4
      %s17 = int_to_ptr.vmem [resolvable:$true] %s16
      %22 = dma.hbm_to_vmem [thread:$0]  %s0, 256, %s17, [#allocation4], 128, 128, 8
    $region5: #{tpu_custom_call.1} parent=1 // pred_fallthru
      _
    // Predicated region
    $region6: #{tpu_custom_call.1} parent=1 // pred_check
      _
    $region7: #{tpu_custom_call.1} parent=1 // pred_check_branch
      %24 = sbr.rel (0) target = $region9
    $region8: #{tpu_custom_call.1} parent=1 // pred_region
      %s26 = ssub.s32 256, 256
      %27 = vsyncadd [#allocation7], %s26
      %s28 = sshll.u32 [#allocation6], 4
      %s29 = int_to_ptr.vmem [resolvable:$true] %s28
      %34 = dma.hbm_to_vmem [thread:$0]  %s1, 256, %s29, [#allocation7], 64, 64, 4
    $region9: #{tpu_custom_call.1} parent=1 // pred_fallthru
      _
    // Predicated region
    $region10: #{tpu_custom_call.1} parent=1 // pred_check
      _
    $region11: #{tpu_custom_call.1} parent=1 // pred_check_branch
      %36 = sbr.rel (0) target = $region13
    $region12: #{tpu_custom_call.1} parent=1 // pred_region
      _
    $region13: #{tpu_custom_call.1} parent=1 // pred_fallthru
      _
    // Predicated region
    $region14: #{tpu_custom_call.1} parent=1 // pred_check
      _
    $region15: #{tpu_custom_call.1} parent=1 // pred_check_branch
      %38 = sbr.rel (0) target = $region17
    $region16: #{tpu_custom_call.1} parent=1 // pred_region
      %39 = dma.done [#allocation4], 256
    $region17: #{tpu_custom_call.1} parent=1 // pred_fallthru
      _
    // Predicated region
    $region18: #{tpu_custom_call.1} parent=1 // pred_check
      _
    $region19: #{tpu_custom_call.1} parent=1 // pred_check_branch
      %41 = sbr.rel (0) target = $region21
    $region20: #{tpu_custom_call.1} parent=1 // pred_region
      %42 = dma.done [#allocation7], 256
    $region21: #{tpu_custom_call.1} parent=1 // pred_fallthru
      _
    %p44 = scmp.eq.s32.totalorder 0, 0
    // Predicated region
    $region22: #{tpu_custom_call.1} parent=1 // pred_check
      %p45 = pneg %p44
    $region23: #{tpu_custom_call.1} parent=1 // pred_check_branch
      %47 = sbr.rel (%p45) target = $region25
    $region24: #{tpu_custom_call.1} parent=1 // pred_region
      %vm48 = vcmask 785408
      %49 = vst.msk [vmem:[#allocation2] sm:$0xff] %vm48, 0.0
      %50 = vst.msk [vmem:[#allocation2 + $0x8] sm:$0xff] %vm48, 0.0
    $region25: #{tpu_custom_call.1} parent=1 // pred_fallthru
      _
    %v51 = vld [vmem:[#allocation2] sm:$0xff]
    %v52 = vld [vmem:[#allocation2 + $0x8] sm:$0xff]
    %v53 = vld [vmem:[#allocation3] sm:$0xff]
    %v54 = vld [vmem:[#allocation3 + $0x8] sm:$0xff]
    %v55 = vpack.c.bf16 %v54, %v53
    %v56 = vld [vmem:[#allocation6] sm:$0xf]
    %v57 = vld [vmem:[#allocation6 + $0x4] sm:$0xf]
    %v58 = vld [vmem:[#allocation6 + $0x8] sm:$0xf]
    %v59 = vld [vmem:[#allocation6 + $0xc] sm:$0xf]
    %v64 = vunpack.c.l.b16 %v56
    %v65 = vunpack.c.l.b16 %v57
    %v66 = vunpack.c.l.b16 %v58
    %v67 = vunpack.c.l.b16 %v59
    %v68 = vpack.c.b16 %v65, %v64
    %v69 = vpack.c.b16 %v67, %v66
    %vm72 = vcmask 261120
    %v74 = vsel %vm72, %v55, 0
    %76 = vmatprep.subr.bf16.mxu0 0
    %77 = vmatpush1.bf16.msra.mxu0 %v68
    %78 = vmatprep.subr.bf16.mxu0 0
    %79 = vmatpush1.bf16.msra.mxu0 %v69
    %80 = vmatprep.subr.bf16.mxu0 0
    %81 = vmatpush1.bf16.msra.mxu0 0
    %82 = vmatprep.subr.bf16.mxu0 0
    %83 = vmatpush1.bf16.msra.mxu0 0
    %84 = vmatprep.subr.bf16.mxu0 0
    %85 = vmatpush1.bf16.msra.mxu0 0
    %86 = vmatprep.subr.bf16.mxu0 0
    %87 = vmatpush1.bf16.msra.mxu0 0
    %88 = vmatprep.subr.bf16.mxu0 0
    %89 = vmatpush1.bf16.msra.mxu0 0
    %90 = vmatprep.subr.bf16.mxu0 0
    %91 = vmatpush1.bf16.msra.mxu0 0
    %92 = vmatprep.subr.bf16.mxu0 0
    %93 = vmatpush1.bf16.msra.mxu0 0
    %94 = vmatprep.subr.bf16.mxu0 0
    %95 = vmatpush1.bf16.msra.mxu0 0
    %96 = vmatprep.subr.bf16.mxu0 0
    %97 = vmatpush1.bf16.msra.mxu0 0
    %98 = vmatprep.subr.bf16.mxu0 0
    %99 = vmatpush1.bf16.msra.mxu0 0
    %100 = vmatprep.subr.bf16.mxu0 0
    %101 = vmatpush1.bf16.msra.mxu0 0
    %102 = vmatprep.subr.bf16.mxu0 0
    %103 = vmatpush1.bf16.msra.mxu0 0
    %104 = vmatprep.subr.bf16.mxu0 0
    %105 = vmatpush1.bf16.msra.mxu0 0
    %106 = vmatprep.subr.bf16.mxu0 0
    %107 = vmatpush1.bf16.msra.mxu0 0
    %108 = vmatprep.mubr.bf16.mxu0 0
    %109 = vmatmul.mubr.bf16.gmra.mrb[0].mxu0 %v74
    %v110 = vpop.f32.mrb[0].mxu0
    %v111 = vadd.f32 0.0, %v110
    %v112 = vpop.f32.mrb[0].mxu0
    %v113 = vpop.f32.mrb[0].mxu0
    %v114 = vadd.f32 0.0, %v113
    %v115 = vpop.f32.mrb[0].mxu0
    %116 = vdwg.mxu0
    %v117 = vadd.f32 %v51, %v111
    %v118 = vadd.f32 %v52, %v114
    %vm119 = vcmask 785408
    %120 = vst.msk [vmem:[#allocation2] sm:$0xff] %vm119, %v117
    %121 = vst.msk [vmem:[#allocation2 + $0x8] sm:$0xff] %vm119, %v118
    // Predicated region
    $region26: #{tpu_custom_call.1} parent=1 // pred_check
      %p122 = pneg %p44
    $region27: #{tpu_custom_call.1} parent=1 // pred_check_branch
      %124 = sbr.rel (%p122) target = $region29
    $region28: #{tpu_custom_call.1} parent=1 // pred_region
      %v125 = vld [vmem:[#allocation2] sm:$0xff]
      %v126 = vld [vmem:[#allocation2 + $0x8] sm:$0xff]
      %v127 = vld [vmem:[%s2] sm:$0x1]
      %v129 = vlaneseq
      %v130 = vshrl.u32 %v129, 7
      %v131 = vsub.s32 0, %v130
      %v132 = vrot.slane %v127, %v131
      %v134 = vadd.f32 %v125, %v132
      %v135 = vadd.f32 %v126, %v132
      %v136 = vpack.c.bf16 %v135, %v134
      %v138 = vunpack.c.l.b16 %v136
      %v139 = vunpack.c.h.b16 %v136
      %v140 = vpack.c.b16 %v138, %v138
      %v141 = vpack.c.b16 %v139, %v139
      %vm144 = vcmask 781312
      %145 = vst.msk [vmem:[#allocation8] sm:$0xf] %vm144, %v140
      %146 = vst.msk [vmem:[#allocation8 + $0x4] sm:$0xf] %vm144, %v141
    $region29: #{tpu_custom_call.1} parent=1 // pred_fallthru
      _
    // Predicated region
    $region30: #{tpu_custom_call.1} parent=1 // pred_check
      _
    $region31: #{tpu_custom_call.1} parent=1 // pred_check_branch
      %148 = sbr.rel (0) target = $region33
    $region32: #{tpu_custom_call.1} parent=1 // pred_region
      %s150 = ssub.s32 128, 128
      %151 = vsyncadd [#allocation5], %s150
      %s152 = sshll.u32 [#allocation8], 4
      %s153 = int_to_ptr.vmem [resolvable:$true] %s152
      %158 = dma.vmem_to_hbm [thread:$0]  %s153, 128, %s3, [#allocation5], 64, 64, 4
    $region33: #{tpu_custom_call.1} parent=1 // pred_fallthru
      _
    // Predicated region
    $region34: #{tpu_custom_call.1} parent=1 // pred_check
      _
    $region35: #{tpu_custom_call.1} parent=1 // pred_check_branch
      %160 = sbr.rel (0) target = $region37
    $region36: #{tpu_custom_call.1} parent=1 // pred_region
      %161 = dma.done [#allocation5], 128
    $region37: #{tpu_custom_call.1} parent=1 // pred_fallthru
      _
    %162 = vsyncpa [#allocation4], 1
    %163 = vsyncpa [#allocation7], 1
    %164 = vsyncpa [#allocation5], 1

</llo_original>
